<compile_context>
chip_gen: v7x
topology: tpu7x:2x2x1
jax: 0.10.0
libtpu: 0.0.40
codegen_flags: <defaults>
</compile_context>

<pallas_src>
import jax
import jax.numpy as jnp
from jax import lax
from jax.experimental import pallas as pl
from jax.experimental.pallas import tpu as pltpu

EPS = 1e-5   # BatchNorm2d default eps
C = 3        # channels fixed by the Conv2d(3, 3, 1, stride=2)


def fused_kernel(p_ref, x_ref, out_ref):
    """p_ref  : (18,) f32 SMEM.  [0:9] = conv weight (out_ch-major, in_ch),
                [9:12] = conv bias, [12:15] = BN gamma, [15:18] = BN beta.
       x_ref  : (C*H/4, 4*W) f32 VMEM, bitcast view of x (1, C, H, W):
                row r = (c, h//4), lane l encodes h%4 = l // W, w = l % W.
       out_ref: (2*C*Hd, Wd) f32.  Rows ordered (half, c, hq):
                rows [0 : C*Hd)  = BN(conv(x)) downsampled  (v1 half of cat)
                rows [C*Hd : )   = conv(x)      downsampled  (v2 half of cat)
    """
    R, L = x_ref.shape
    Wf = L // 4                 # original image width W
    Hq = R // C                 # H // 4  (= downsampled height Hd)
    Wd = Wf // 4                # downsampled width
    inv_n = 1.0 / float(Hq * Wf)   # 1 / (#conv-output pixels per channel)

    # --- parameters: single packed SMEM vector, scalar reads ---------------
    wgt = [[p_ref[o * C + c] for c in range(C)] for o in range(C)]
    bias = [p_ref[9 + o] for o in range(C)]
    gmm = [p_ref[12 + o] for o in range(C)]
    bta = [p_ref[15 + o] for o in range(C)]

    # per-input-channel slabs (Hq, 4*Wf); rows = hq, lanes = (h%4, w)
    xc = [x_ref[c * Hq:(c + 1) * Hq, :] for c in range(C)]

    # mask of real conv-output positions: h even (lane%(2W) < W) AND w even.
    lane = lax.broadcasted_iota(jnp.int32, (Hq, L), 1)
    stat_mask = ((lane % (2 * Wf)) < Wf) & ((lane % 2) == 0)
    zeros = jnp.zeros((Hq, L), jnp.float32)

    # --- 1x1-conv channel mix: 3 whole-slab VPU FMAs per output channel ----
    # (Computed at all pixels of the slab; the extra odd-h/odd-w columns are
    #  masked out of the statistics and never stored -- ~37K wasted FMAs,
    #  well inside the VALU slack, and it keeps every access lane-contiguous.)
    y = []
    for o in range(C):
        acc = xc[0] * wgt[o][0] + bias[o]
        for c in range(1, C):
            acc = acc + xc[c] * wgt[o][c]
        y.append(acc)                                     # (Hq, L)

    # --- BatchNorm training statistics per channel (two-pass, biased var) --
    mean, scale = [], []
    for o in range(C):
        s = jnp.sum(jnp.where(stat_mask, y[o], zeros), axis=-1, keepdims=True)
        m = jnp.sum(s, axis=0, keepdims=True) * inv_n               # (1, 1)
        d = jnp.where(stat_mask, y[o] - m, zeros)
        v = jnp.sum(jnp.sum(d * d, axis=-1, keepdims=True),
                    axis=0, keepdims=True) * inv_n                  # (1, 1)
        mean.append(m)
        scale.append(gmm[o] * lax.rsqrt(v + EPS))                   # (1, 1)

    # --- downsampled conv output --------------------------------------------
    # h % 4 == 0  -> static lane slice [0:Wf] of the slab;
    # w % 4 == 0  -> compact 64 lanes to 16 with a one-hot selection matmul
    # (the standard gather-via-MXU trick; exact since each column has a single
    #  nonzero).
    y_ds = jnp.concatenate([y[o][:, 0:Wf] for o in range(C)], axis=0)  # (C*Hq, Wf)
    wi = lax.broadcasted_iota(jnp.int32, (Wf, Wd), 0)
    ji = lax.broadcasted_iota(jnp.int32, (Wf, Wd), 1)
    sel = (wi == 4 * ji).astype(jnp.float32)                           # (Wf, Wd)
    yq = jnp.dot(y_ds, sel, preferred_element_type=jnp.float32)        # (C*Hq, Wd)

    # --- assemble flat (2*C*Hq, Wd) slab: BN half then conv half ------------
    bn = jnp.concatenate(
        [(yq[o * Hq:(o + 1) * Hq, :] - mean[o]) * scale[o] + bta[o]
         for o in range(C)], axis=0)                                   # (C*Hq, Wd)
    out_ref[...] = jnp.concatenate([bn, yq], axis=0)
    # TODO(synk): v4 = relu(v3) in the PyTorch module is dead code (never used
    # by the returned value), so it is intentionally not computed.


@jax.jit
def model_forward(x, wconv, bconv, gamma, beta):
    N, Cin, H, W = x.shape
    assert N == 1 and Cin == C and H % 4 == 0 and W % 4 == 0
    # TODO(synk): for N > 1 the batch axis must be treated as a BN-stats
    # reduction (accumulate partial sum/sumsq, or merge partials across
    # TensorCores), never as an independent "parallel" grid axis.
    Hq, Wd = H // 4, W // 4

    # Bitcast-only input view (no data movement, no extra XLA kernel):
    # row r = (c, h//4), lane l = (h%4)*W + w.
    xv = x.astype(jnp.float32).reshape(C * Hq, 4 * W)

    # One packed parameter vector -> one tiny SMEM DMA.
    p = jnp.concatenate([
        wconv.reshape(C * C).astype(jnp.float32),   # (9,)  out_ch-major
        bconv.astype(jnp.float32),                  # (3,)
        gamma.astype(jnp.float32),                  # (3,)
        beta.astype(jnp.float32),                   # (3,)
    ])

    out_flat = pl.pallas_call(
        fused_kernel,
        out_shape=jax.ShapeDtypeStruct((2 * C * Hq, Wd), jnp.float32),
        in_specs=[
            pl.BlockSpec(memory_space=pltpu.MemorySpace.SMEM),
            pl.BlockSpec(memory_space=pltpu.MemorySpace.VMEM),
        ],
        out_specs=pl.BlockSpec(memory_space=pltpu.MemorySpace.VMEM),
    )(p, xv)

    # Bitcast-only undo: rows are (half, c, hq) in row-major order.
    return out_flat.reshape(2 * N, C, Hq, Wd)


def reference(x, wconv, bconv, gamma, beta):
    """Pure-JAX reference of the PyTorch forward."""
    N, Cin, H, W = x.shape
    xf = x[:, :, ::2, ::2]
    y = jnp.einsum('oc,nchw->nohw', wconv.reshape(Cin, Cin), xf) \
        + bconv[None, :, None, None]
    mean = jnp.mean(y, axis=(0, 2, 3), keepdims=True)
    var = jnp.var(y, axis=(0, 2, 3), keepdims=True)
    v1 = (y - mean) * jax.lax.rsqrt(var + EPS) * gamma[None, :, None, None] \
         + beta[None, :, None, None]
    v3 = jnp.concatenate([v1, y], axis=0)
    v5 = v3[:, :, ::2, ::2]          # nearest interpolate, scale 0.5
    return v5


if __name__ == "__main__":
    key = jax.random.PRNGKey(0)
    kx, kw, kb, kg, kbe = jax.random.split(key, 5)

    # shapes from the module spec (channels fixed at 3 by the conv)
    x1 = jax.random.normal(kx, (1, 3, 64, 64), dtype=jnp.float32)
    wconv = jax.random.normal(kw, (3, 3, 1, 1), dtype=jnp.float32) * 0.5
    bconv = jax.random.normal(kb, (3,), dtype=jnp.float32) * 0.1
    gamma = 1.0 + 0.1 * jax.random.normal(kg, (3,), dtype=jnp.float32)
    beta = 0.05 * jax.random.normal(kbe, (3,), dtype=jnp.float32)

    out = jax.block_until_ready(model_forward(x1, wconv, bconv, gamma, beta))
    ref = reference(x1, wconv, bconv, gamma, beta)
    assert out.shape == ref.shape == (2, 3, 16, 16), out.shape
    assert jnp.allclose(out, ref, rtol=1e-4, atol=1e-4), \
        float(jnp.max(jnp.abs(out - ref)))

    print("KERNEL_OK")
</pallas_src>

<mosaic_0001>
module attributes {stable_mosaic.version = 11 : i64} {
  func.func @fused_kernel(%arg0: memref<18xf32, #tpu.memory_space<smem>>, %arg1: memref<48x256xf32, #tpu.memory_space<vmem>>, %arg2: memref<96x16xf32, #tpu.memory_space<vmem>>) attributes {dimension_semantics = [], scalar_prefetch = 0 : i64, scratch_operands = 0 : i64, tpu.core_type = #tpu.core_type<tc>} {
    %c0 = arith.constant 0 : index
    %0 = memref.load %arg0[%c0] : memref<18xf32, #tpu.memory_space<smem>>
    %c1 = arith.constant 1 : index
    %1 = memref.load %arg0[%c1] : memref<18xf32, #tpu.memory_space<smem>>
    %c2 = arith.constant 2 : index
    %2 = memref.load %arg0[%c2] : memref<18xf32, #tpu.memory_space<smem>>
    %c3 = arith.constant 3 : index
    %3 = memref.load %arg0[%c3] : memref<18xf32, #tpu.memory_space<smem>>
    %c4 = arith.constant 4 : index
    %4 = memref.load %arg0[%c4] : memref<18xf32, #tpu.memory_space<smem>>
    %c5 = arith.constant 5 : index
    %5 = memref.load %arg0[%c5] : memref<18xf32, #tpu.memory_space<smem>>
    %c6 = arith.constant 6 : index
    %6 = memref.load %arg0[%c6] : memref<18xf32, #tpu.memory_space<smem>>
    %c7 = arith.constant 7 : index
    %7 = memref.load %arg0[%c7] : memref<18xf32, #tpu.memory_space<smem>>
    %c8 = arith.constant 8 : index
    %8 = memref.load %arg0[%c8] : memref<18xf32, #tpu.memory_space<smem>>
    %c9 = arith.constant 9 : index
    %9 = memref.load %arg0[%c9] : memref<18xf32, #tpu.memory_space<smem>>
    %c10 = arith.constant 10 : index
    %10 = memref.load %arg0[%c10] : memref<18xf32, #tpu.memory_space<smem>>
    %c11 = arith.constant 11 : index
    %11 = memref.load %arg0[%c11] : memref<18xf32, #tpu.memory_space<smem>>
    %c12 = arith.constant 12 : index
    %12 = memref.load %arg0[%c12] : memref<18xf32, #tpu.memory_space<smem>>
    %c13 = arith.constant 13 : index
    %13 = memref.load %arg0[%c13] : memref<18xf32, #tpu.memory_space<smem>>
    %c14 = arith.constant 14 : index
    %14 = memref.load %arg0[%c14] : memref<18xf32, #tpu.memory_space<smem>>
    %c15 = arith.constant 15 : index
    %15 = memref.load %arg0[%c15] : memref<18xf32, #tpu.memory_space<smem>>
    %c16 = arith.constant 16 : index
    %16 = memref.load %arg0[%c16] : memref<18xf32, #tpu.memory_space<smem>>
    %c17 = arith.constant 17 : index
    %17 = memref.load %arg0[%c17] : memref<18xf32, #tpu.memory_space<smem>>
    %c0_0 = arith.constant 0 : index
    %c0_1 = arith.constant 0 : index
    %18 = vector.load %arg1[%c0_0, %c0_1] : memref<48x256xf32, #tpu.memory_space<vmem>>, vector<16x256xf32>
    %c16_2 = arith.constant 16 : index
    %c0_3 = arith.constant 0 : index
    %19 = vector.load %arg1[%c16_2, %c0_3] : memref<48x256xf32, #tpu.memory_space<vmem>>, vector<16x256xf32>
    %c32 = arith.constant 32 : index
    %c0_4 = arith.constant 0 : index
    %20 = vector.load %arg1[%c32, %c0_4] : memref<48x256xf32, #tpu.memory_space<vmem>>, vector<16x256xf32>
    %21 = tpu.iota {dimensions = array<i32: 1>} : vector<16x256xi32>
    %c128_i32 = arith.constant 128 : i32
    %c0_i32 = arith.constant 0 : i32
    %22 = arith.cmpi eq, %c128_i32, %c0_i32 : i32
    %c1_i32 = arith.constant 1 : i32
    %23 = arith.select %22, %c1_i32, %c128_i32 : i32
    %24 = vector.broadcast %23 : i32 to vector<16x256xi32>
    %25 = arith.remsi %21, %24 : vector<16x256xi32>
    %c0_i32_5 = arith.constant 0 : i32
    %26 = vector.broadcast %c0_i32_5 : i32 to vector<16x256xi32>
    %27 = arith.cmpi ne, %25, %26 : vector<16x256xi32>
    %c0_i32_6 = arith.constant 0 : i32
    %28 = vector.broadcast %c0_i32_6 : i32 to vector<16x256xi32>
    %29 = arith.cmpi slt, %25, %28 : vector<16x256xi32>
    %c0_i32_7 = arith.constant 0 : i32
    %30 = arith.cmpi slt, %23, %c0_i32_7 : i32
    %31 = vector.broadcast %30 : i1 to vector<16x256xi1>
    %32 = vector.broadcast %31 : vector<16x256xi1> to vector<16x256xi1>
    %33 = arith.xori %29, %32 : vector<16x256xi1>
    %34 = arith.andi %33, %27 : vector<16x256xi1>
    %35 = vector.broadcast %23 : i32 to vector<16x256xi32>
    %36 = arith.addi %25, %35 : vector<16x256xi32>
    %37 = arith.select %34, %36, %25 : vector<16x256xi1>, vector<16x256xi32>
    %c64_i32 = arith.constant 64 : i32
    %38 = vector.broadcast %c64_i32 : i32 to vector<16x256xi32>
    %39 = arith.cmpi slt, %37, %38 : vector<16x256xi32>
    %c2_i32 = arith.constant 2 : i32
    %c0_i32_8 = arith.constant 0 : i32
    %40 = arith.cmpi eq, %c2_i32, %c0_i32_8 : i32
    %c1_i32_9 = arith.constant 1 : i32
    %41 = arith.select %40, %c1_i32_9, %c2_i32 : i32
    %42 = vector.broadcast %41 : i32 to vector<16x256xi32>
    %43 = arith.remsi %21, %42 : vector<16x256xi32>
    %c0_i32_10 = arith.constant 0 : i32
    %44 = vector.broadcast %c0_i32_10 : i32 to vector<16x256xi32>
    %45 = arith.cmpi ne, %43, %44 : vector<16x256xi32>
    %c0_i32_11 = arith.constant 0 : i32
    %46 = vector.broadcast %c0_i32_11 : i32 to vector<16x256xi32>
    %47 = arith.cmpi slt, %43, %46 : vector<16x256xi32>
    %c0_i32_12 = arith.constant 0 : i32
    %48 = arith.cmpi slt, %41, %c0_i32_12 : i32
    %49 = vector.broadcast %48 : i1 to vector<16x256xi1>
    %50 = vector.broadcast %49 : vector<16x256xi1> to vector<16x256xi1>
    %51 = arith.xori %47, %50 : vector<16x256xi1>
    %52 = arith.andi %51, %45 : vector<16x256xi1>
    %53 = vector.broadcast %41 : i32 to vector<16x256xi32>
    %54 = arith.addi %43, %53 : vector<16x256xi32>
    %55 = arith.select %52, %54, %43 : vector<16x256xi1>, vector<16x256xi32>
    %c0_i32_13 = arith.constant 0 : i32
    %56 = vector.broadcast %c0_i32_13 : i32 to vector<16x256xi32>
    %57 = arith.cmpi eq, %55, %56 : vector<16x256xi32>
    %58 = arith.andi %39, %57 : vector<16x256xi1>
    %cst = arith.constant 0.000000e+00 : f32
    %59 = vector.broadcast %cst : f32 to vector<16x256xf32>
    %60 = vector.broadcast %0 : f32 to vector<16x256xf32>
    %61 = arith.mulf %18, %60 : vector<16x256xf32>
    %62 = vector.broadcast %9 : f32 to vector<16x256xf32>
    %63 = arith.addf %61, %62 : vector<16x256xf32>
    %64 = vector.broadcast %1 : f32 to vector<16x256xf32>
    %65 = arith.mulf %19, %64 : vector<16x256xf32>
    %66 = arith.addf %63, %65 : vector<16x256xf32>
    %67 = vector.broadcast %2 : f32 to vector<16x256xf32>
    %68 = arith.mulf %20, %67 : vector<16x256xf32>
    %69 = arith.addf %66, %68 : vector<16x256xf32>
    %70 = vector.broadcast %3 : f32 to vector<16x256xf32>
    %71 = arith.mulf %18, %70 : vector<16x256xf32>
    %72 = vector.broadcast %10 : f32 to vector<16x256xf32>
    %73 = arith.addf %71, %72 : vector<16x256xf32>
    %74 = vector.broadcast %4 : f32 to vector<16x256xf32>
    %75 = arith.mulf %19, %74 : vector<16x256xf32>
    %76 = arith.addf %73, %75 : vector<16x256xf32>
    %77 = vector.broadcast %5 : f32 to vector<16x256xf32>
    %78 = arith.mulf %20, %77 : vector<16x256xf32>
    %79 = arith.addf %76, %78 : vector<16x256xf32>
    %80 = vector.broadcast %6 : f32 to vector<16x256xf32>
    %81 = arith.mulf %18, %80 : vector<16x256xf32>
    %82 = vector.broadcast %11 : f32 to vector<16x256xf32>
    %83 = arith.addf %81, %82 : vector<16x256xf32>
    %84 = vector.broadcast %7 : f32 to vector<16x256xf32>
    %85 = arith.mulf %19, %84 : vector<16x256xf32>
    %86 = arith.addf %83, %85 : vector<16x256xf32>
    %87 = vector.broadcast %8 : f32 to vector<16x256xf32>
    %88 = arith.mulf %20, %87 : vector<16x256xf32>
    %89 = arith.addf %86, %88 : vector<16x256xf32>
    %90 = arith.select %58, %69, %59 : vector<16x256xi1>, vector<16x256xf32>
    %cst_14 = arith.constant dense<0.000000e+00> : vector<16xf32>
    %91 = vector.multi_reduction <add>, %90, %cst_14 [1] : vector<16x256xf32> to vector<16xf32>
    %92 = vector.shape_cast %91 : vector<16xf32> to vector<16x1xf32>
    %cst_15 = arith.constant dense<0.000000e+00> : vector<1xf32>
    %93 = vector.multi_reduction <add>, %92, %cst_15 [0] : vector<16x1xf32> to vector<1xf32>
    %94 = vector.shape_cast %93 : vector<1xf32> to vector<1x1xf32>
    %cst_16 = arith.constant 9.765625E-4 : f32
    %95 = vector.broadcast %cst_16 : f32 to vector<1x1xf32>
    %96 = arith.mulf %94, %95 : vector<1x1xf32>
    %97 = vector.broadcast %96 : vector<1x1xf32> to vector<16x256xf32>
    %98 = arith.subf %69, %97 : vector<16x256xf32>
    %99 = arith.select %58, %98, %59 : vector<16x256xi1>, vector<16x256xf32>
    %100 = arith.mulf %99, %99 : vector<16x256xf32>
    %cst_17 = arith.constant dense<0.000000e+00> : vector<16xf32>
    %101 = vector.multi_reduction <add>, %100, %cst_17 [1] : vector<16x256xf32> to vector<16xf32>
    %102 = vector.shape_cast %101 : vector<16xf32> to vector<16x1xf32>
    %cst_18 = arith.constant dense<0.000000e+00> : vector<1xf32>
    %103 = vector.multi_reduction <add>, %102, %cst_18 [0] : vector<16x1xf32> to vector<1xf32>
    %104 = vector.shape_cast %103 : vector<1xf32> to vector<1x1xf32>
    %cst_19 = arith.constant 9.765625E-4 : f32
    %105 = vector.broadcast %cst_19 : f32 to vector<1x1xf32>
    %106 = arith.mulf %104, %105 : vector<1x1xf32>
    %cst_20 = arith.constant 9.99999974E-6 : f32
    %107 = vector.broadcast %cst_20 : f32 to vector<1x1xf32>
    %108 = arith.addf %106, %107 : vector<1x1xf32>
    %109 = math.rsqrt %108 : vector<1x1xf32>
    %110 = vector.broadcast %12 : f32 to vector<1x1xf32>
    %111 = arith.mulf %110, %109 : vector<1x1xf32>
    %112 = arith.select %58, %79, %59 : vector<16x256xi1>, vector<16x256xf32>
    %cst_21 = arith.constant dense<0.000000e+00> : vector<16xf32>
    %113 = vector.multi_reduction <add>, %112, %cst_21 [1] : vector<16x256xf32> to vector<16xf32>
    %114 = vector.shape_cast %113 : vector<16xf32> to vector<16x1xf32>
    %cst_22 = arith.constant dense<0.000000e+00> : vector<1xf32>
    %115 = vector.multi_reduction <add>, %114, %cst_22 [0] : vector<16x1xf32> to vector<1xf32>
    %116 = vector.shape_cast %115 : vector<1xf32> to vector<1x1xf32>
    %cst_23 = arith.constant 9.765625E-4 : f32
    %117 = vector.broadcast %cst_23 : f32 to vector<1x1xf32>
    %118 = arith.mulf %116, %117 : vector<1x1xf32>
    %119 = vector.broadcast %118 : vector<1x1xf32> to vector<16x256xf32>
    %120 = arith.subf %79, %119 : vector<16x256xf32>
    %121 = arith.select %58, %120, %59 : vector<16x256xi1>, vector<16x256xf32>
    %122 = arith.mulf %121, %121 : vector<16x256xf32>
    %cst_24 = arith.constant dense<0.000000e+00> : vector<16xf32>
    %123 = vector.multi_reduction <add>, %122, %cst_24 [1] : vector<16x256xf32> to vector<16xf32>
    %124 = vector.shape_cast %123 : vector<16xf32> to vector<16x1xf32>
    %cst_25 = arith.constant dense<0.000000e+00> : vector<1xf32>
    %125 = vector.multi_reduction <add>, %124, %cst_25 [0] : vector<16x1xf32> to vector<1xf32>
    %126 = vector.shape_cast %125 : vector<1xf32> to vector<1x1xf32>
    %cst_26 = arith.constant 9.765625E-4 : f32
    %127 = vector.broadcast %cst_26 : f32 to vector<1x1xf32>
    %128 = arith.mulf %126, %127 : vector<1x1xf32>
    %cst_27 = arith.constant 9.99999974E-6 : f32
    %129 = vector.broadcast %cst_27 : f32 to vector<1x1xf32>
    %130 = arith.addf %128, %129 : vector<1x1xf32>
    %131 = math.rsqrt %130 : vector<1x1xf32>
    %132 = vector.broadcast %13 : f32 to vector<1x1xf32>
    %133 = arith.mulf %132, %131 : vector<1x1xf32>
    %134 = arith.select %58, %89, %59 : vector<16x256xi1>, vector<16x256xf32>
    %cst_28 = arith.constant dense<0.000000e+00> : vector<16xf32>
    %135 = vector.multi_reduction <add>, %134, %cst_28 [1] : vector<16x256xf32> to vector<16xf32>
    %136 = vector.shape_cast %135 : vector<16xf32> to vector<16x1xf32>
    %cst_29 = arith.constant dense<0.000000e+00> : vector<1xf32>
    %137 = vector.multi_reduction <add>, %136, %cst_29 [0] : vector<16x1xf32> to vector<1xf32>
    %138 = vector.shape_cast %137 : vector<1xf32> to vector<1x1xf32>
    %cst_30 = arith.constant 9.765625E-4 : f32
    %139 = vector.broadcast %cst_30 : f32 to vector<1x1xf32>
    %140 = arith.mulf %138, %139 : vector<1x1xf32>
    %141 = vector.broadcast %140 : vector<1x1xf32> to vector<16x256xf32>
    %142 = arith.subf %89, %141 : vector<16x256xf32>
    %143 = arith.select %58, %142, %59 : vector<16x256xi1>, vector<16x256xf32>
    %144 = arith.mulf %143, %143 : vector<16x256xf32>
    %cst_31 = arith.constant dense<0.000000e+00> : vector<16xf32>
    %145 = vector.multi_reduction <add>, %144, %cst_31 [1] : vector<16x256xf32> to vector<16xf32>
    %146 = vector.shape_cast %145 : vector<16xf32> to vector<16x1xf32>
    %cst_32 = arith.constant dense<0.000000e+00> : vector<1xf32>
    %147 = vector.multi_reduction <add>, %146, %cst_32 [0] : vector<16x1xf32> to vector<1xf32>
    %148 = vector.shape_cast %147 : vector<1xf32> to vector<1x1xf32>
    %cst_33 = arith.constant 9.765625E-4 : f32
    %149 = vector.broadcast %cst_33 : f32 to vector<1x1xf32>
    %150 = arith.mulf %148, %149 : vector<1x1xf32>
    %cst_34 = arith.constant 9.99999974E-6 : f32
    %151 = vector.broadcast %cst_34 : f32 to vector<1x1xf32>
    %152 = arith.addf %150, %151 : vector<1x1xf32>
    %153 = math.rsqrt %152 : vector<1x1xf32>
    %154 = vector.broadcast %14 : f32 to vector<1x1xf32>
    %155 = arith.mulf %154, %153 : vector<1x1xf32>
    %156 = vector.extract_strided_slice %69 {offsets = [0, 0], sizes = [16, 64], strides = [1, 1]} : vector<16x256xf32> to vector<16x64xf32>
    %157 = vector.extract_strided_slice %79 {offsets = [0, 0], sizes = [16, 64], strides = [1, 1]} : vector<16x256xf32> to vector<16x64xf32>
    %158 = vector.extract_strided_slice %89 {offsets = [0, 0], sizes = [16, 64], strides = [1, 1]} : vector<16x256xf32> to vector<16x64xf32>
    %159 = tpu.concatenate %156, %157, %158 in 0 : vector<16x64xf32>, vector<16x64xf32>, vector<16x64xf32> -> vector<48x64xf32>
    %160 = tpu.iota {dimensions = array<i32: 0>} : vector<64x16xi32>
    %161 = tpu.iota {dimensions = array<i32: 1>} : vector<64x16xi32>
    %c4_i32 = arith.constant 4 : i32
    %162 = vector.broadcast %c4_i32 : i32 to vector<64x16xi32>
    %163 = arith.muli %162, %161 : vector<64x16xi32>
    %164 = arith.cmpi eq, %160, %163 : vector<64x16xi32>
    %165 = arith.extui %164 : vector<64x16xi1> to vector<64x16xi32>
    %166 = arith.sitofp %165 : vector<64x16xi32> to vector<64x16xf32>
    %cst_35 = arith.constant dense<0.000000e+00> : vector<48x16xf32>
    %167 = tpu.matmul %159, %166, %cst_35 {dimension_numbers = #tpu.dot_dimension_numbers<[1], [0], [0], [1], [0, 0, 1, 1], [], []>} : vector<48x64xf32>, vector<64x16xf32>, vector<48x16xf32> -> vector<48x16xf32>
    %168 = vector.extract_strided_slice %167 {offsets = [0, 0], sizes = [16, 16], strides = [1, 1]} : vector<48x16xf32> to vector<16x16xf32>
    %169 = vector.broadcast %96 : vector<1x1xf32> to vector<16x16xf32>
    %170 = arith.subf %168, %169 : vector<16x16xf32>
    %171 = vector.broadcast %111 : vector<1x1xf32> to vector<16x16xf32>
    %172 = arith.mulf %170, %171 : vector<16x16xf32>
    %173 = vector.broadcast %15 : f32 to vector<16x16xf32>
    %174 = arith.addf %172, %173 : vector<16x16xf32>
    %175 = vector.extract_strided_slice %167 {offsets = [16, 0], sizes = [16, 16], strides = [1, 1]} : vector<48x16xf32> to vector<16x16xf32>
    %176 = vector.broadcast %118 : vector<1x1xf32> to vector<16x16xf32>
    %177 = arith.subf %175, %176 : vector<16x16xf32>
    %178 = vector.broadcast %133 : vector<1x1xf32> to vector<16x16xf32>
    %179 = arith.mulf %177, %178 : vector<16x16xf32>
    %180 = vector.broadcast %16 : f32 to vector<16x16xf32>
    %181 = arith.addf %179, %180 : vector<16x16xf32>
    %182 = vector.extract_strided_slice %167 {offsets = [32, 0], sizes = [16, 16], strides = [1, 1]} : vector<48x16xf32> to vector<16x16xf32>
    %183 = vector.broadcast %140 : vector<1x1xf32> to vector<16x16xf32>
    %184 = arith.subf %182, %183 : vector<16x16xf32>
    %185 = vector.broadcast %155 : vector<1x1xf32> to vector<16x16xf32>
    %186 = arith.mulf %184, %185 : vector<16x16xf32>
    %187 = vector.broadcast %17 : f32 to vector<16x16xf32>
    %188 = arith.addf %186, %187 : vector<16x16xf32>
    %189 = tpu.concatenate %174, %181, %188 in 0 : vector<16x16xf32>, vector<16x16xf32>, vector<16x16xf32> -> vector<48x16xf32>
    %190 = tpu.concatenate %189, %167 in 0 : vector<48x16xf32>, vector<48x16xf32> -> vector<96x16xf32>
    %c0_36 = arith.constant 0 : index
    %c0_37 = arith.constant 0 : index
    %191 = vector.load %arg2[%c0_36, %c0_37] : memref<96x16xf32, #tpu.memory_space<vmem>>, vector<96x16xf32>
    tpu.vector_store %arg2[%c0_36, %c0_37], %190 {strides = array<i32>} : memref<96x16xf32, #tpu.memory_space<vmem>>, vector<96x16xf32>,
    return
  }
}

</mosaic_0001>

<llo_original>
// kernel: model_forward.1
$region0: #{model_forward.1}
  #allocation0 [shape = 'u32[]', space=smem, size = 0x4, offset = 0x4, fixed_abs, tag = 'smem constant byte address 0x4 - core index']
  #allocation1 [shape = 'u32[144,128]{1,0:T(1,128)}', space=vmem, size = 0x12000, scoped, tag = 'internal scratch']
  %s0 = inlined_call_operand.vmem [shape: f32[18], index: 0, kind: input, shape index: {}]
  %s1 = inlined_call_operand.vmem [shape: f32[48,256], index: 1, kind: input, shape index: {}]
  %s2 = inlined_call_operand.hbm [shape: f32[96,16], index: 2, kind: output, shape index: {}]
  %s3 = sld [smem:[#allocation0]]
  $region22: #{model_forward.1} parent=0
    _
  %s5 = ssub.s32 1, %s3
  %s6 = scalar_select 0, %s5, %s3
  $region1: #{model_forward.1} parent=0
    #allocation2 [shape = 'u8[512]{0}', space=smem, size = 0x200, scoped, tag = 'input window, operand 0, single buffered']
    #allocation3 [shape = 's32[1]{0}', space=sflag, size = 0x4, scoped, tag = 'scoped memory for model_forward.1']
    #allocation4 [shape = 's32[1]{0}', space=sflag, size = 0x4, scoped, tag = 'scoped memory for model_forward.1']
    #allocation5 [shape = 'u8[49152]{0}', space=vmem, size = 0xc000, scoped, tag = 'output window, operand 0, single buffered']
    %7 = vsyncpa [#allocation4], 0
    %8 = vsyncpa [#allocation3], 0
    // Predicated region
    $region2: #{model_forward.1} parent=1 // pred_check
      _
    $region3: #{model_forward.1} parent=1 // pred_check_branch
      %10 = sbr.rel (0) target = $region5
    $region4: #{model_forward.1} parent=1 // pred_region
      %s12 = ssub.s32 16, 16
      %13 = vsyncadd [#allocation4], %s12
      %s15 = sshll.u32 %s0, 4
      %s16 = int_to_ptr.vmem [resolvable:$true] %s15
      %18 = dma.vmem_to_smem %s16, 16, [#allocation2], [#allocation4]
    $region5: #{model_forward.1} parent=1 // pred_fallthru
      _
    // Predicated region
    $region6: #{model_forward.1} parent=1 // pred_check
      _
    $region7: #{model_forward.1} parent=1 // pred_check_branch
      %20 = sbr.rel (0) target = $region9
    $region8: #{model_forward.1} parent=1 // pred_region
      _
    $region9: #{model_forward.1} parent=1 // pred_fallthru
      _
    // Predicated region
    $region10: #{model_forward.1} parent=1 // pred_check
      _
    $region11: #{model_forward.1} parent=1 // pred_check_branch
      %22 = sbr.rel (0) target = $region13
    $region12: #{model_forward.1} parent=1 // pred_region
      %23 = dma.done [#allocation4], 16
    $region13: #{model_forward.1} parent=1 // pred_fallthru
      _
    %24 = sfence
    %s25 = sld [smem:[#allocation2]]
    %s26 = sld [smem:[#allocation2 + $0x1]]
    %s27 = sld [smem:[#allocation2 + $0x2]]
    %s28 = sld [smem:[#allocation2 + $0x3]]
    %s29 = sld [smem:[#allocation2 + $0x4]]
    %s30 = sld [smem:[#allocation2 + $0x5]]
    %s31 = sld [smem:[#allocation2 + $0x6]]
    %s32 = sld [smem:[#allocation2 + $0x7]]
    %s33 = sld [smem:[#allocation2 + $0x8]]
    %s34 = sld [smem:[#allocation2 + $0x9]]
    %s35 = sld [smem:[#allocation2 + $0xa]]
    %s36 = sld [smem:[#allocation2 + $0xb]]
    %s37 = sld [smem:[#allocation2 + $0xc]]
    %s38 = sld [smem:[#allocation2 + $0xd]]
    %s39 = sld [smem:[#allocation2 + $0xe]]
    %s40 = sld [smem:[#allocation2 + $0xf]]
    %s41 = sld [smem:[#allocation2 + $0x10]]
    %s42 = sld [smem:[#allocation2 + $0x11]]
    %v43 = vld [vmem:[%s1] sm:$0xff]
    %v44 = vld [vmem:[%s1 + $0x8] sm:$0xff]
    %v45 = vld [vmem:[%s1 + $0x10] sm:$0xff]
    %v46 = vld [vmem:[%s1 + $0x18] sm:$0xff]
    %v47 = vld [vmem:[%s1 + $0x20] sm:$0xff]
    %v48 = vld [vmem:[%s1 + $0x28] sm:$0xff]
    %v49 = vld [vmem:[%s1 + $0x30] sm:$0xff]
    %v50 = vld [vmem:[%s1 + $0x38] sm:$0xff]
    %v51 = vld [vmem:[%s1 + $0x40] sm:$0xff]
    %v52 = vld [vmem:[%s1 + $0x48] sm:$0xff]
    %v53 = vld [vmem:[%s1 + $0x50] sm:$0xff]
    %v54 = vld [vmem:[%s1 + $0x58] sm:$0xff]
    %v55 = vlaneseq
    %v56 = vand.u32 %v55, 127
    %v57 = vadd.s32 %v56, 128
    %vm58 = vcmp.lt.s32.totalorder %v56, 0
    %v59 = vsub.s32 0, %v56
    %v60 = vsel %vm58, %v59, %v56
    %v61 = vshrl.u32 %v60, 7
    %v62 = vand.u32 %v60, 127
    %v63 = vsub.s32 0, %v62
    %v64 = vsel %vm58, %v63, %v62
    %vm65 = vcmp.lt.s32.totalorder %v57, 0
    %v66 = vsub.s32 0, %v57
    %v67 = vsel %vm65, %v66, %v57
    %v68 = vshrl.u32 %v67, 7
    %v69 = vand.u32 %v67, 127
    %v70 = vsub.s32 0, %v69
    %v71 = vsel %vm65, %v70, %v69
    %vm72 = vcmp.ne.s32.totalorder %v64, 0
    %vm73 = vcmp.ne.s32.totalorder %v71, 0
    %vm74 = vcmp.lt.s32.totalorder %v64, 0
    %vm75 = vcmp.lt.s32.totalorder %v71, 0
    %vm76 = vmand %vm74, %vm72
    %vm77 = vmand %vm75, %vm73
    %v78 = vadd.s32 %v64, 128
    %v79 = vadd.s32 %v71, 128
    %v80 = vsel %vm76, %v78, %v64
    %v81 = vsel %vm77, %v79, %v71
    %vm82 = vcmp.lt.s32.totalorder %v80, 64
    %vm83 = vcmp.lt.s32.totalorder %v81, 64
    %vm84 = vcmp.lt.s32.totalorder %v56, 0
    %v85 = vsub.s32 0, %v56
    %v86 = vsel %vm84, %v85, %v56
    %v87 = vshrl.u32 %v86, 1
    %v88 = vand.u32 %v86, 1
    %v89 = vsub.s32 0, %v88
    %v90 = vsel %vm84, %v89, %v88
    %vm91 = vcmp.lt.s32.totalorder %v57, 0
    %v92 = vsub.s32 0, %v57
    %v93 = vsel %vm91, %v92, %v57
    %v94 = vshrl.u32 %v93, 1
    %v95 = vand.u32 %v93, 1
    %v96 = vsub.s32 0, %v95
    %v97 = vsel %vm91, %v96, %v95
    %vm98 = vcmp.ne.s32.totalorder %v90, 0
    %vm99 = vcmp.ne.s32.totalorder %v97, 0
    %vm100 = vcmp.lt.s32.totalorder %v90, 0
    %vm101 = vcmp.lt.s32.totalorder %v97, 0
    %vm102 = vmand %vm100, %vm98
    %vm103 = vmand %vm101, %vm99
    %v104 = vadd.s32 %v90, 2
    %v105 = vadd.s32 %v97, 2
    %v106 = vsel %vm102, %v104, %v90
    %v107 = vsel %vm103, %v105, %v97
    %vm108 = vcmp.eq.s32.totalorder %v106, 0
    %vm109 = vcmp.eq.s32.totalorder %v107, 0
    %vm110 = vmand %vm82, %vm108
    %vm111 = vmand %vm83, %vm109
    %v112 = vstv %s25
    %v113 = vmul.f32 %v43, %v112
    %v114 = vmul.f32 %v44, %v112
    %v115 = vmul.f32 %v45, %v112
    %v116 = vmul.f32 %v46, %v112
    %v117 = vstv %s34
    %v118 = vadd.f32 %v113, %v117
    %v119 = vadd.f32 %v114, %v117
    %v120 = vadd.f32 %v115, %v117
    %v121 = vadd.f32 %v116, %v117
    %v122 = vstv %s26
    %v123 = vmul.f32 %v47, %v122
    %v124 = vmul.f32 %v48, %v122
    %v125 = vmul.f32 %v49, %v122
    %v126 = vmul.f32 %v50, %v122
    %v127 = vadd.f32 %v118, %v123
    %v128 = vadd.f32 %v119, %v124
    %v129 = vadd.f32 %v120, %v125
    %v130 = vadd.f32 %v121, %v126
    %v131 = vstv %s27
    %v132 = vmul.f32 %v51, %v131
    %v133 = vmul.f32 %v52, %v131
    %v134 = vmul.f32 %v53, %v131
    %v135 = vmul.f32 %v54, %v131
    %v136 = vadd.f32 %v127, %v132
    %v137 = vadd.f32 %v128, %v133
    %v138 = vadd.f32 %v129, %v134
    %v139 = vadd.f32 %v130, %v135
    %v140 = vstv %s28
    %v141 = vmul.f32 %v43, %v140
    %v142 = vmul.f32 %v44, %v140
    %v143 = vmul.f32 %v45, %v140
    %v144 = vmul.f32 %v46, %v140
    %v145 = vstv %s35
    %v146 = vadd.f32 %v141, %v145
    %v147 = vadd.f32 %v142, %v145
    %v148 = vadd.f32 %v143, %v145
    %v149 = vadd.f32 %v144, %v145
    %v150 = vstv %s29
    %v151 = vmul.f32 %v47, %v150
    %v152 = vmul.f32 %v48, %v150
    %v153 = vmul.f32 %v49, %v150
    %v154 = vmul.f32 %v50, %v150
    %v155 = vadd.f32 %v146, %v151
    %v156 = vadd.f32 %v147, %v152
    %v157 = vadd.f32 %v148, %v153
    %v158 = vadd.f32 %v149, %v154
    %v159 = vstv %s30
    %v160 = vmul.f32 %v51, %v159
    %v161 = vmul.f32 %v52, %v159
    %v162 = vmul.f32 %v53, %v159
    %v163 = vmul.f32 %v54, %v159
    %v164 = vadd.f32 %v155, %v160
    %v165 = vadd.f32 %v156, %v161
    %v166 = vadd.f32 %v157, %v162
    %v167 = vadd.f32 %v158, %v163
    %v168 = vstv %s31
    %v169 = vmul.f32 %v43, %v168
    %v170 = vmul.f32 %v44, %v168
    %v171 = vmul.f32 %v45, %v168
    %v172 = vmul.f32 %v46, %v168
    %v173 = vstv %s36
    %v174 = vadd.f32 %v169, %v173
    %v175 = vadd.f32 %v170, %v173
    %v176 = vadd.f32 %v171, %v173
    %v177 = vadd.f32 %v172, %v173
    %v178 = vstv %s32
    %v179 = vmul.f32 %v47, %v178
    %v180 = vmul.f32 %v48, %v178
    %v181 = vmul.f32 %v49, %v178
    %v182 = vmul.f32 %v50, %v178
    %v183 = vadd.f32 %v174, %v179
    %v184 = vadd.f32 %v175, %v180
    %v185 = vadd.f32 %v176, %v181
    %v186 = vadd.f32 %v177, %v182
    %v187 = vstv %s33
    %v188 = vmul.f32 %v51, %v187
    %v189 = vmul.f32 %v52, %v187
    %v190 = vmul.f32 %v53, %v187
    %v191 = vmul.f32 %v54, %v187
    %v192 = vadd.f32 %v183, %v188
    %v193 = vadd.f32 %v184, %v189
    %v194 = vadd.f32 %v185, %v190
    %v195 = vadd.f32 %v186, %v191
    %v196 = vsel %vm110, %v136, 0.0
    %v197 = vsel %vm111, %v137, 0.0
    %v198 = vsel %vm110, %v138, 0.0
    %v199 = vsel %vm111, %v139, 0.0
    %v200 = vadd.f32 %v196, %v197
    %201 = vadd.xlane.f32.xlu0 %v200
    %v202 = vpop.xlane.xlu0 %201
    %v203 = vadd.f32 %v198, %v199
    %204 = vadd.xlane.f32.xlu0 %v203
    %v205 = vpop.xlane.xlu0 %204
    %v206 = vadd.f32 %v202, %v205
    %v207 = vrot.slane %v206, 4
    %v208 = vadd.f32 %v206, %v207
    %v209 = vrot.slane %v208, 2
    %v210 = vadd.f32 %v208, %v209
    %v211 = vrot.slane %v210, 1
    %v212 = vadd.f32 %v210, %v211
    %v213 = vmul.f32 %v212, 0.0009765625
    %v214 = vsub.f32 %v136, %v213
    %v215 = vsub.f32 %v137, %v213
    %v216 = vsub.f32 %v138, %v213
    %v217 = vsub.f32 %v139, %v213
    %v218 = vsel %vm110, %v214, 0.0
    %v219 = vsel %vm111, %v215, 0.0
    %v220 = vsel %vm110, %v216, 0.0
    %v221 = vsel %vm111, %v217, 0.0
    %v222 = vmul.f32 %v218, %v218
    %v223 = vmul.f32 %v219, %v219
    %v224 = vmul.f32 %v220, %v220
    %v225 = vmul.f32 %v221, %v221
    %v226 = vadd.f32 %v222, %v223
    %227 = vadd.xlane.f32.xlu0 %v226
    %v228 = vpop.xlane.xlu0 %227
    %v229 = vadd.f32 %v224, %v225
    %230 = vadd.xlane.f32.xlu0 %v229
    %v231 = vpop.xlane.xlu0 %230
    %v232 = vadd.f32 %v228, %v231
    %v233 = vrot.slane %v232, 4
    %v234 = vadd.f32 %v232, %v233
    %v235 = vrot.slane %v234, 2
    %v236 = vadd.f32 %v234, %v235
    %v237 = vrot.slane %v236, 1
    %v238 = vadd.f32 %v236, %v237
    %v239 = vmul.f32 %v238, 0.0009765625
    %v240 = vadd.f32 %v239, 1e-05
    %v241 = vrsqrt.pop %v240
    %v242 = vstv %s37
    %v243 = vmul.f32 %v242, %v241
    %v244 = vsel %vm110, %v164, 0.0
    %v245 = vsel %vm111, %v165, 0.0
    %v246 = vsel %vm110, %v166, 0.0
    %v247 = vsel %vm111, %v167, 0.0
    %v248 = vadd.f32 %v244, %v245
    %249 = vadd.xlane.f32.xlu0 %v248
    %v250 = vpop.xlane.xlu0 %249
    %v251 = vadd.f32 %v246, %v247
    %252 = vadd.xlane.f32.xlu0 %v251
    %v253 = vpop.xlane.xlu0 %252
    %v254 = vadd.f32 %v250, %v253
    %v255 = vrot.slane %v254, 4
    %v256 = vadd.f32 %v254, %v255
    %v257 = vrot.slane %v256, 2
    %v258 = vadd.f32 %v256, %v257
    %v259 = vrot.slane %v258, 1
    %v260 = vadd.f32 %v258, %v259
    %v261 = vmul.f32 %v260, 0.0009765625
    %v262 = vsub.f32 %v164, %v261
    %v263 = vsub.f32 %v165, %v261
    %v264 = vsub.f32 %v166, %v261
    %v265 = vsub.f32 %v167, %v261
    %v266 = vsel %vm110, %v262, 0.0
    %v267 = vsel %vm111, %v263, 0.0
    %v268 = vsel %vm110, %v264, 0.0
    %v269 = vsel %vm111, %v265, 0.0
    %v270 = vmul.f32 %v266, %v266
    %v271 = vmul.f32 %v267, %v267
    %v272 = vmul.f32 %v268, %v268
    %v273 = vmul.f32 %v269, %v269
    %v274 = vadd.f32 %v270, %v271
    %275 = vadd.xlane.f32.xlu0 %v274
    %v276 = vpop.xlane.xlu0 %275
    %v277 = vadd.f32 %v272, %v273
    %278 = vadd.xlane.f32.xlu0 %v277
    %v279 = vpop.xlane.xlu0 %278
    %v280 = vadd.f32 %v276, %v279
    %v281 = vrot.slane %v280, 4
    %v282 = vadd.f32 %v280, %v281
    %v283 = vrot.slane %v282, 2
    %v284 = vadd.f32 %v282, %v283
    %v285 = vrot.slane %v284, 1
    %v286 = vadd.f32 %v284, %v285
    %v287 = vmul.f32 %v286, 0.0009765625
    %v288 = vadd.f32 %v287, 1e-05
    %v289 = vrsqrt.pop %v288
    %v290 = vstv %s38
    %v291 = vmul.f32 %v290, %v289
    %v292 = vsel %vm110, %v192, 0.0
    %v293 = vsel %vm111, %v193, 0.0
    %v294 = vsel %vm110, %v194, 0.0
    %v295 = vsel %vm111, %v195, 0.0
    %v296 = vadd.f32 %v292, %v293
    %297 = vadd.xlane.f32.xlu0 %v296
    %v298 = vpop.xlane.xlu0 %297
    %v299 = vadd.f32 %v294, %v295
    %300 = vadd.xlane.f32.xlu0 %v299
    %v301 = vpop.xlane.xlu0 %300
    %v302 = vadd.f32 %v298, %v301
    %v303 = vrot.slane %v302, 4
    %v304 = vadd.f32 %v302, %v303
    %v305 = vrot.slane %v304, 2
    %v306 = vadd.f32 %v304, %v305
    %v307 = vrot.slane %v306, 1
    %v308 = vadd.f32 %v306, %v307
    %v309 = vmul.f32 %v308, 0.0009765625
    %v310 = vsub.f32 %v192, %v309
    %v311 = vsub.f32 %v193, %v309
    %v312 = vsub.f32 %v194, %v309
    %v313 = vsub.f32 %v195, %v309
    %v314 = vsel %vm110, %v310, 0.0
    %v315 = vsel %vm111, %v311, 0.0
    %v316 = vsel %vm110, %v312, 0.0
    %v317 = vsel %vm111, %v313, 0.0
    %v318 = vmul.f32 %v314, %v314
    %v319 = vmul.f32 %v315, %v315
    %v320 = vmul.f32 %v316, %v316
    %v321 = vmul.f32 %v317, %v317
    %v322 = vadd.f32 %v318, %v319
    %323 = vadd.xlane.f32.xlu0 %v322
    %v324 = vpop.xlane.xlu0 %323
    %v325 = vadd.f32 %v320, %v321
    %326 = vadd.xlane.f32.xlu0 %v325
    %v327 = vpop.xlane.xlu0 %326
    %v328 = vadd.f32 %v324, %v327
    %v329 = vrot.slane %v328, 4
    %v330 = vadd.f32 %v328, %v329
    %v331 = vrot.slane %v330, 2
    %v332 = vadd.f32 %v330, %v331
    %v333 = vrot.slane %v332, 1
    %v334 = vadd.f32 %v332, %v333
    %v335 = vmul.f32 %v334, 0.0009765625
    %v336 = vadd.f32 %v335, 1e-05
    %v337 = vrsqrt.pop %v336
    %v338 = vstv %s39
    %v339 = vmul.f32 %v338, %v337
    %v340 = vlaneseq
    %v341 = vshrl.u32 %v340, 7
    %v342 = vadd.s32 %v341, 8
    %v343 = vadd.s32 %v341, 16
    %v344 = vadd.s32 %v341, 24
    %v345 = vadd.s32 %v341, 32
    %v346 = vadd.s32 %v341, 40
    %v347 = vadd.s32 %v341, 48
    %v348 = vadd.s32 %v341, 56
    %v349 = vmul.u32 %v56, 4
    %vm350 = vcmp.eq.s32.totalorder %v341, %v349
    %vm351 = vcmp.eq.s32.totalorder %v342, %v349
    %vm352 = vcmp.eq.s32.totalorder %v343, %v349
    %vm353 = vcmp.eq.s32.totalorder %v344, %v349
    %vm354 = vcmp.eq.s32.totalorder %v345, %v349
    %vm355 = vcmp.eq.s32.totalorder %v346, %v349
    %vm356 = vcmp.eq.s32.totalorder %v347, %v349
    %vm357 = vcmp.eq.s32.totalorder %v348, %v349
    %v358 = vsel %vm350, 1, 0
    %v359 = vsel %vm351, 1, 0
    %v360 = vsel %vm352, 1, 0
    %v361 = vsel %vm353, 1, 0
    %v362 = vsel %vm354, 1, 0
    %v363 = vsel %vm355, 1, 0
    %v364 = vsel %vm356, 1, 0
    %v365 = vsel %vm357, 1, 0
    %v366 = vcvt.s32.f32 %v358
    %v367 = vcvt.s32.f32 %v359
    %v368 = vcvt.s32.f32 %v360
    %v369 = vcvt.s32.f32 %v361
    %v370 = vcvt.s32.f32 %v362
    %v371 = vcvt.s32.f32 %v363
    %v372 = vcvt.s32.f32 %v364
    %v373 = vcvt.s32.f32 %v365
    %vm374 = vcmask 523264
    %v376 = vsel %vm374, %v136, 0
    %v379 = vsel %vm374, %v138, 0
    %v382 = vsel %vm374, %v164, 0
    %v385 = vsel %vm374, %v166, 0
    %v388 = vsel %vm374, %v192, 0
    %v391 = vsel %vm374, %v194, 0
    %393 = vmatprep.subr.mxu0 0.0
    %394 = vmatpush1.msra.mxu0 %v366
    %395 = vmatprep.subr.mxu0 0.0
    %396 = vmatpush1.msra.mxu0 %v367
    %397 = vmatprep.subr.mxu0 0.0
    %398 = vmatpush1.msra.mxu0 %v368
    %399 = vmatprep.subr.mxu0 0.0
    %400 = vmatpush1.msra.mxu0 %v369
    %401 = vmatprep.subr.mxu0 0.0
    %402 = vmatpush1.msra.mxu0 %v370
    %403 = vmatprep.subr.mxu0 0.0
    %404 = vmatpush1.msra.mxu0 %v371
    %405 = vmatprep.subr.mxu0 0.0
    %406 = vmatpush1.msra.mxu0 %v372
    %407 = vmatprep.subr.mxu0 0.0
    %408 = vmatpush1.msra.mxu0 %v373
    %409 = vmatprep.subr.mxu0 0.0
    %410 = vmatpush1.msra.mxu0 0.0
    %411 = vmatprep.subr.mxu0 0.0
    %412 = vmatpush1.msra.mxu0 0.0
    %413 = vmatprep.subr.mxu0 0.0
    %414 = vmatpush1.msra.mxu0 0.0
    %415 = vmatprep.subr.mxu0 0.0
    %416 = vmatpush1.msra.mxu0 0.0
    %417 = vmatprep.subr.mxu0 0.0
    %418 = vmatpush1.msra.mxu0 0.0
    %419 = vmatprep.subr.mxu0 0.0
    %420 = vmatpush1.msra.mxu0 0.0
    %421 = vmatprep.subr.mxu0 0.0
    %422 = vmatpush1.msra.mxu0 0.0
    %423 = vmatprep.subr.mxu0 0.0
    %424 = vmatpush1.msra.mxu0 0.0
    %425 = vmatprep.subr.mxu0 0.0
    %426 = vmatpush1.msra.mxu0 0.0
    %427 = vmatprep.subr.mxu0 0.0
    %428 = vmatpush1.msra.mxu0 0.0
    %429 = vmatprep.subr.mxu0 0.0
    %430 = vmatpush1.msra.mxu0 0.0
    %431 = vmatprep.subr.mxu0 0.0
    %432 = vmatpush1.msra.mxu0 0.0
    %433 = vmatprep.subr.mxu0 0.0
    %434 = vmatpush1.msra.mxu0 0.0
    %435 = vmatprep.subr.mxu0 0.0
    %436 = vmatpush1.msra.mxu0 0.0
    %437 = vmatprep.subr.mxu0 0.0
    %438 = vmatpush1.msra.mxu0 0.0
    %439 = vmatprep.subr.mxu0 0.0
    %440 = vmatpush1.msra.mxu0 0.0
    %441 = vmatprep.subr.mxu0 0.0
    %442 = vmatpush1.msra.mxu0 0.0
    %443 = vmatprep.subr.mxu0 0.0
    %444 = vmatpush1.msra.mxu0 0.0
    %445 = vmatprep.subr.mxu0 0.0
    %446 = vmatpush1.msra.mxu0 0.0
    %447 = vmatprep.subr.mxu0 0.0
    %448 = vmatpush1.msra.mxu0 0.0
    %449 = vmatprep.subr.mxu0 0.0
    %450 = vmatpush1.msra.mxu0 0.0
    %451 = vmatprep.subr.mxu0 0.0
    %452 = vmatpush1.msra.mxu0 0.0
    %453 = vmatprep.subr.mxu0 0.0
    %454 = vmatpush1.msra.mxu0 0.0
    %455 = vmatprep.subr.mxu0 0.0
    %456 = vmatpush1.msra.mxu0 0.0
    %457 = vmatprep.mubr.f32.mxu0 0.0
    %458 = vmatmul.mubr.f32.gmra.mrb[0].mxu0 %v376
    %v459 = vpop.f32.mrb[0].mxu0
    %v460 = vadd.f32 0.0, %v459
    %v461 = vpop.f32.mrb[0].mxu0
    %462 = vmatprep.mubr.f32.mxu0 0.0
    %463 = vmatmul.mubr.f32.gmra.mrb[0].mxu0 %v379
    %v464 = vpop.f32.mrb[0].mxu0
    %v465 = vadd.f32 0.0, %v464
    %v466 = vpop.f32.mrb[0].mxu0
    %467 = vmatprep.mubr.f32.mxu0 0.0
    %468 = vmatmul.mubr.f32.gmra.mrb[0].mxu0 %v382
    %v469 = vpop.f32.mrb[0].mxu0
    %v470 = vadd.f32 0.0, %v469
    %v471 = vpop.f32.mrb[0].mxu0
    %472 = vmatprep.mubr.f32.mxu0 0.0
    %473 = vmatmul.mubr.f32.gmra.mrb[0].mxu0 %v385
    %v474 = vpop.f32.mrb[0].mxu0
    %v475 = vadd.f32 0.0, %v474
    %v476 = vpop.f32.mrb[0].mxu0
    %477 = vmatprep.mubr.f32.mxu0 0.0
    %478 = vmatmul.mubr.f32.gmra.mrb[0].mxu0 %v388
    %v479 = vpop.f32.mrb[0].mxu0
    %v480 = vadd.f32 0.0, %v479
    %v481 = vpop.f32.mrb[0].mxu0
    %482 = vmatprep.mubr.f32.mxu0 0.0
    %483 = vmatmul.mubr.f32.gmra.mrb[0].mxu0 %v391
    %v484 = vpop.f32.mrb[0].mxu0
    %v485 = vadd.f32 0.0, %v484
    %v486 = vpop.f32.mrb[0].mxu0
    %487 = vdwg.mxu0
    %v488 = vsub.f32 %v460, %v213
    %v489 = vsub.f32 %v465, %v213
    %v490 = vmul.f32 %v488, %v243
    %v491 = vmul.f32 %v489, %v243
    %v492 = vstv %s40
    %v493 = vadd.f32 %v490, %v492
    %v494 = vadd.f32 %v491, %v492
    %v495 = vsub.f32 %v470, %v261
    %v496 = vsub.f32 %v475, %v261
    %v497 = vmul.f32 %v495, %v291
    %v498 = vmul.f32 %v496, %v291
    %v499 = vstv %s41
    %v500 = vadd.f32 %v497, %v499
    %v501 = vadd.f32 %v498, %v499
    %v502 = vsub.f32 %v480, %v309
    %v503 = vsub.f32 %v485, %v309
    %v504 = vmul.f32 %v502, %v339
    %v505 = vmul.f32 %v503, %v339
    %v506 = vstv %s42
    %v507 = vadd.f32 %v504, %v506
    %v508 = vadd.f32 %v505, %v506
    %vm509 = vcmask 130048
    %510 = vst.msk [vmem:[#allocation5] sm:$0xff] %vm509, %v493
    %511 = vst.msk [vmem:[#allocation5 + $0x8] sm:$0xff] %vm509, %v494
    %512 = vst.msk [vmem:[#allocation5 + $0x10] sm:$0xff] %vm509, %v500
    %513 = vst.msk [vmem:[#allocation5 + $0x18] sm:$0xff] %vm509, %v501
    %514 = vst.msk [vmem:[#allocation5 + $0x20] sm:$0xff] %vm509, %v507
    %515 = vst.msk [vmem:[#allocation5 + $0x28] sm:$0xff] %vm509, %v508
    %516 = vst.msk [vmem:[#allocation5 + $0x30] sm:$0xff] %vm509, %v460
    %517 = vst.msk [vmem:[#allocation5 + $0x38] sm:$0xff] %vm509, %v465
    %518 = vst.msk [vmem:[#allocation5 + $0x40] sm:$0xff] %vm509, %v470
    %519 = vst.msk [vmem:[#allocation5 + $0x48] sm:$0xff] %vm509, %v475
    %520 = vst.msk [vmem:[#allocation5 + $0x50] sm:$0xff] %vm509, %v480
    %521 = vst.msk [vmem:[#allocation5 + $0x58] sm:$0xff] %vm509, %v485
    // Predicated region
    $region14: #{model_forward.1} parent=1 // pred_check
      _
    $region15: #{model_forward.1} parent=1 // pred_check_branch
      %523 = sbr.rel (0) target = $region17
    $region16: #{model_forward.1} parent=1 // pred_region
      %s525 = ssub.s32 1536, 1536
      %526 = vsyncadd [#allocation3], %s525
      %s527 = sshll.u32 [#allocation5], 4
      %s528 = int_to_ptr.vmem [resolvable:$true] %s527
      %533 = dma.vmem_to_hbm [thread:$0]  %s528, 1536, %s2, [#allocation3], 128, 128, 8
    $region17: #{model_forward.1} parent=1 // pred_fallthru
      _
    // Predicated region
    $region18: #{model_forward.1} parent=1 // pred_check
      _
    $region19: #{model_forward.1} parent=1 // pred_check_branch
      %535 = sbr.rel (0) target = $region21
    $region20: #{model_forward.1} parent=1 // pred_region
      %536 = dma.done [#allocation3], 1536
    $region21: #{model_forward.1} parent=1 // pred_fallthru
      _
    %537 = vsyncpa [#allocation3], 1
    %538 = vsyncpa [#allocation4], 1

</llo_original>
